<compile_context>
chip_gen: v5e
topology: v5e:2x2
jax: 0.10.0
libtpu: 0.0.40
codegen_flags: <defaults>
</compile_context>

<pallas_src>
import math
import functools

import jax
import jax.numpy as jnp
from jax.experimental import pallas as pl
from jax.experimental.pallas import tpu as pltpu


def _round_up(x, m):
    return ((x + m - 1) // m) * m


def _batch_tile(B):
    """Rows per grid step.

    * >=2 grid steps whenever B >= 16 so dimension_semantics=('parallel',)
      actually shards across v7x's two TensorCores (and gives DMA<->compute
      pipelining on v5e/v6e).
    * Capped at 128 rows to keep the f32 intermediates within vreg budget.
    """
    if B >= 16:
        return min(128, _round_up((B + 1) // 2, 8))
    return _round_up(B, 8)


def _timestep_embedder_kernel(t_ref, freqs_ref, w1_ref, b1_ref, w2_ref, b2_ref,
                              out_ref):
    # t_ref:     (TB, 1)        f32
    # freqs_ref: (1, half)      f32   (precomputed static table)
    # w1_ref:    (freq_dim, Hp) bf16  (single K=freq_dim operand)
    # b1/b2:     (1, Hp)        f32
    # w2_ref:    (Hp, Hp)       bf16
    # out_ref:   (TB, Hp)       out dtype
    t = t_ref[...]                                    # (TB, 1)
    freqs = freqs_ref[...]                            # (1, half)
    args = t * freqs                                  # (TB, half) f32 broadcast

    # cos|sin concatenated along the lane axis: both halves are 128-lane
    # aligned, so this is layout-friendly and feeds one K=freq_dim matmul
    # (fills the 256-deep v6e/v7x MXU in a single pass).
    emb = jnp.concatenate([jnp.cos(args), jnp.sin(args)], axis=-1)

    h = (jnp.dot(emb.astype(w1_ref.dtype), w1_ref[...],
                 preferred_element_type=jnp.float32)
         + b1_ref[...])

    # SiLU in f32 on the VPU/EUP (v5e has no bf16 elementwise path).
    # TODO(synk): on v6e/v7x the SiLU + bias adds could run in bf16 to halve
    # elementwise vreg traffic; negligible at this Hp so kept f32 everywhere.
    h = h * jax.nn.sigmoid(h)

    out = (jnp.dot(h.astype(w2_ref.dtype), w2_ref[...],
                   preferred_element_type=jnp.float32)
           + b2_ref[...])
    out_ref[...] = out.astype(out_ref.dtype)


def prepare_timestep_embedder_params(w1, b1, w2, b2, *, freq_dim=256,
                                     max_period=10000,
                                     param_dtype=jnp.bfloat16):
    """One-time (init-time) preprocessing; keep the result cached and reuse it
    for every forward call so no weight padding/casting runs in the hot path.

    w1: (freq_dim, H), b1: (H,), w2: (H, H), b2: (H,)
    """
    # TODO(synk): odd freq_dim would need the torch `if dim % 2` zero-pad
    # column; freq_dim is even here (256) so that branch is not emitted.
    assert freq_dim % 2 == 0, "odd frequency_embedding_size not supported"
    H = w1.shape[1]
    Hp = _round_up(H, 128)          # lane-dense hidden/output dimension
    half = freq_dim // 2

    freqs = jnp.exp(
        -math.log(max_period) * jnp.arange(half, dtype=jnp.float32) / half
    ).reshape(1, half)

    def pad_cols(x, n):
        return jnp.pad(x, ((0, 0), (0, n - x.shape[1])))

    w1p = pad_cols(w1.astype(jnp.float32), Hp).astype(param_dtype)   # (freq_dim, Hp)
    b1p = pad_cols(b1.reshape(1, H).astype(jnp.float32), Hp)          # (1, Hp) f32
    w2p = jnp.pad(w2.astype(jnp.float32),
                  ((0, Hp - H), (0, Hp - H))).astype(param_dtype)     # (Hp, Hp)
    b2p = pad_cols(b2.reshape(1, H).astype(jnp.float32), Hp)          # (1, Hp) f32

    return dict(freqs=freqs, w1=w1p, b1=b1p, w2=w2p, b2=b2p,
                H=H, Hp=Hp, half=half)


@functools.partial(jax.jit, static_argnames=("H", "Hp", "half", "out_dtype"))
def _timestep_embedder_forward(t, freqs, w1, b1, w2, b2, *, H, Hp, half,
                               out_dtype):
    B = t.shape[0]
    freq_dim = 2 * half
    TB = _batch_tile(B)
    Bp = _round_up(B, TB)
    grid = (Bp // TB,)

    t2d = jnp.pad(t.astype(jnp.float32).reshape(B, 1), ((0, Bp - B), (0, 0)))

    out_isz = jnp.dtype(out_dtype).itemsize

    def nbytes(a):
        return a.size * a.dtype.itemsize

    cost = pl.CostEstimate(
        flops=2 * Bp * (freq_dim * Hp + Hp * Hp),
        transcendentals=Bp * (2 * half + Hp),          # cos + sin + sigmoid-exp
        bytes_accessed=(nbytes(w1) + nbytes(w2) + nbytes(b1) + nbytes(b2)
                        + nbytes(freqs) + Bp * 4 + Bp * Hp * out_isz),
    )

    # VMEM budget: double-buffered inputs/outputs + resident weights, plus
    # headroom; capped at the v5e/v6e physical 128 MiB.
    # TODO(synk): at real DiT hidden sizes on v7x (64 MiB physical VMEM),
    # single-buffer the constant-index weight BlockSpecs instead of raising
    # the limit.
    weight_bytes = nbytes(w1) + nbytes(w2) + nbytes(b1) + nbytes(b2) + nbytes(freqs)
    io_bytes = TB * 4 + TB * Hp * out_isz
    vmem_limit = min(128 * 1024 * 1024,
                     max(32 * 1024 * 1024,
                         2 * (weight_bytes + io_bytes) + 8 * 1024 * 1024))

    out = pl.pallas_call(
        _timestep_embedder_kernel,
        out_shape=jax.ShapeDtypeStruct((Bp, Hp), out_dtype),
        grid=grid,
        in_specs=[
            pl.BlockSpec((TB, 1), lambda i: (i, 0)),        # t tile (per step)
            pl.BlockSpec((1, half), lambda i: (0, 0)),      # freq table (resident)
            pl.BlockSpec((freq_dim, Hp), lambda i: (0, 0)), # w1 (resident)
            pl.BlockSpec((1, Hp), lambda i: (0, 0)),        # b1 (resident)
            pl.BlockSpec((Hp, Hp), lambda i: (0, 0)),       # w2 (resident)
            pl.BlockSpec((1, Hp), lambda i: (0, 0)),        # b2 (resident)
        ],
        out_specs=pl.BlockSpec((TB, Hp), lambda i: (i, 0)),
        compiler_params=pltpu.CompilerParams(
            dimension_semantics=("parallel",),
            vmem_limit_bytes=vmem_limit),
        cost_estimate=cost,
    )(t2d, freqs, w1, b1, w2, b2)

    return out[:B, :H]


def timestep_embedder(t, params, *, out_dtype=jnp.float32):
    """Forward pass. `params` comes from prepare_timestep_embedder_params()."""
    return _timestep_embedder_forward(
        t, params["freqs"], params["w1"], params["b1"], params["w2"],
        params["b2"], H=params["H"], Hp=params["Hp"], half=params["half"],
        out_dtype=out_dtype)


def _reference(t, w1, b1, w2, b2, freq_dim=256, max_period=10000,
               param_dtype=jnp.float32):
    """Pure-JAX reference. param_dtype=bf16 mirrors the kernel's mixed precision."""
    half = freq_dim // 2
    freqs = jnp.exp(-math.log(max_period) *
                    jnp.arange(half, dtype=jnp.float32) / half)
    args = t.astype(jnp.float32)[:, None] * freqs[None]
    emb = jnp.concatenate([jnp.cos(args), jnp.sin(args)], axis=-1)

    def q(x):
        return x.astype(param_dtype).astype(jnp.float32)

    h = q(emb) @ q(w1) + b1
    h = h * jax.nn.sigmoid(h)
    return q(h) @ q(w2) + b2


def _check(t, w1, b1, w2, b2, params, freq_dim):
    out = timestep_embedder(t, params)
    out = jax.block_until_ready(out)
    assert out.shape == (t.shape[0], w1.shape[1])

    # Tight check vs a reference mirroring the kernel's bf16 matmul inputs.
    ref_bf16 = _reference(t, w1, b1, w2, b2, freq_dim=freq_dim,
                          param_dtype=jnp.bfloat16)
    assert jnp.allclose(out, ref_bf16, atol=1e-3, rtol=1e-3), (
        jnp.max(jnp.abs(out - ref_bf16)))

    # Loose check vs the pure-f32 PyTorch-equivalent reference.
    ref_f32 = _reference(t, w1, b1, w2, b2, freq_dim=freq_dim,
                         param_dtype=jnp.float32)
    assert jnp.allclose(out, ref_f32, atol=1e-2, rtol=1e-2), (
        jnp.max(jnp.abs(out - ref_f32)))
    return out


if __name__ == "__main__":
    hidden_size = 32
    freq_dim = 256

    key = jax.random.PRNGKey(0)
    k_t, k_w1, k_b1, k_w2, k_b2, k_t2 = jax.random.split(key, 6)

    # Deterministic synthetic parameters (weights stored as (in, out)).
    w1 = jax.random.normal(k_w1, (freq_dim, hidden_size), jnp.float32) * 0.02
    b1 = jax.random.normal(k_b1, (hidden_size,), jnp.float32) * 0.02
    w2 = jax.random.normal(k_w2, (hidden_size, hidden_size), jnp.float32) * 0.02
    b2 = jax.random.normal(k_b2, (hidden_size,), jnp.float32) * 0.02

    # One-time preprocessing (hoisted out of the per-call path).
    params = prepare_timestep_embedder_params(w1, b1, w2, b2,
                                              freq_dim=freq_dim)

    # Shipped configuration: B=8 -> single grid step.
    t8 = jax.random.uniform(k_t, (8,), jnp.float32) * 1000.0
    _check(t8, w1, b1, w2, b2, params, freq_dim)

    # Larger batch: exercises the multi-step 'parallel' grid (>=2 steps so
    # v7x's second TensorCore is used) and the padded-batch-row path.
    t40 = jax.random.uniform(k_t2, (40,), jnp.float32) * 1000.0
    _check(t40, w1, b1, w2, b2, params, freq_dim)

    print("KERNEL_OK")
</pallas_src>

<mosaic_0001>
module attributes {stable_mosaic.version = 11 : i64} {
  func.func @_timestep_embedder_kernel(%arg0: i32, %arg1: memref<8x1xf32, #tpu.memory_space<vmem>>, %arg2: memref<1x128xf32, #tpu.memory_space<vmem>>, %arg3: memref<256x128xbf16, #tpu.memory_space<vmem>>, %arg4: memref<1x128xf32, #tpu.memory_space<vmem>>, %arg5: memref<128x128xbf16, #tpu.memory_space<vmem>>, %arg6: memref<1x128xf32, #tpu.memory_space<vmem>>, %arg7: memref<8x128xf32, #tpu.memory_space<vmem>>) attributes {dimension_semantics = [#tpu.dimension_semantics<parallel>], iteration_bounds = array<i64: 1>, scalar_prefetch = 0 : i64, scratch_operands = 0 : i64, tpu.core_type = #tpu.core_type<tc>, window_params = [{transform_indices = @transform_0, window_bounds = array<i64: 8, 1>}, {pipeline_mode = #tpu.pipeline_mode<synchronous>, transform_indices = @transform_1, window_bounds = array<i64: 1, 128>}, {pipeline_mode = #tpu.pipeline_mode<synchronous>, transform_indices = @transform_2, window_bounds = array<i64: 256, 128>}, {pipeline_mode = #tpu.pipeline_mode<synchronous>, transform_indices = @transform_3, window_bounds = array<i64: 1, 128>}, {pipeline_mode = #tpu.pipeline_mode<synchronous>, transform_indices = @transform_4, window_bounds = array<i64: 128, 128>}, {pipeline_mode = #tpu.pipeline_mode<synchronous>, transform_indices = @transform_5, window_bounds = array<i64: 1, 128>}, {transform_indices = @transform_6, window_bounds = array<i64: 8, 128>}]} {
    %c0 = arith.constant 0 : index
    %c0_0 = arith.constant 0 : index
    %0 = vector.load %arg1[%c0, %c0_0] : memref<8x1xf32, #tpu.memory_space<vmem>>, vector<8x1xf32>
    %c0_1 = arith.constant 0 : index
    %c0_2 = arith.constant 0 : index
    %1 = vector.load %arg2[%c0_1, %c0_2] : memref<1x128xf32, #tpu.memory_space<vmem>>, vector<1x128xf32>
    %2 = vector.broadcast %0 : vector<8x1xf32> to vector<8x128xf32>
    %3 = vector.broadcast %1 : vector<1x128xf32> to vector<8x128xf32>
    %4 = arith.mulf %2, %3 : vector<8x128xf32>
    %5 = math.cos %4 : vector<8x128xf32>
    %6 = math.sin %4 : vector<8x128xf32>
    %7 = tpu.concatenate %5, %6 in 1 : vector<8x128xf32>, vector<8x128xf32> -> vector<8x256xf32>
    %8 = arith.truncf %7 : vector<8x256xf32> to vector<8x256xbf16>
    %c0_3 = arith.constant 0 : index
    %c0_4 = arith.constant 0 : index
    %9 = vector.load %arg3[%c0_3, %c0_4] : memref<256x128xbf16, #tpu.memory_space<vmem>>, vector<256x128xbf16>
    %cst = arith.constant dense<0.000000e+00> : vector<8x128xf32>
    %10 = tpu.matmul %8, %9, %cst {dimension_numbers = #tpu.dot_dimension_numbers<[1], [0], [0], [1], [0, 0, 1, 1], [], []>} : vector<8x256xbf16>, vector<256x128xbf16>, vector<8x128xf32> -> vector<8x128xf32>
    %c0_5 = arith.constant 0 : index
    %c0_6 = arith.constant 0 : index
    %11 = vector.load %arg4[%c0_5, %c0_6] : memref<1x128xf32, #tpu.memory_space<vmem>>, vector<1x128xf32>
    %12 = vector.broadcast %11 : vector<1x128xf32> to vector<8x128xf32>
    %13 = arith.addf %10, %12 : vector<8x128xf32>
    %14 = arith.negf %13 : vector<8x128xf32>
    %15 = math.exp %14 : vector<8x128xf32>
    %cst_7 = arith.constant 1.000000e+00 : f32
    %16 = vector.broadcast %cst_7 : f32 to vector<8x128xf32>
    %17 = arith.addf %16, %15 : vector<8x128xf32>
    %18 = arith.divf %16, %17 : vector<8x128xf32>
    %19 = arith.mulf %13, %18 : vector<8x128xf32>
    %20 = arith.truncf %19 : vector<8x128xf32> to vector<8x128xbf16>
    %c0_8 = arith.constant 0 : index
    %c0_9 = arith.constant 0 : index
    %21 = vector.load %arg5[%c0_8, %c0_9] : memref<128x128xbf16, #tpu.memory_space<vmem>>, vector<128x128xbf16>
    %cst_10 = arith.constant dense<0.000000e+00> : vector<8x128xf32>
    %22 = tpu.matmul %20, %21, %cst_10 {dimension_numbers = #tpu.dot_dimension_numbers<[1], [0], [0], [1], [0, 0, 1, 1], [], []>} : vector<8x128xbf16>, vector<128x128xbf16>, vector<8x128xf32> -> vector<8x128xf32>
    %c0_11 = arith.constant 0 : index
    %c0_12 = arith.constant 0 : index
    %23 = vector.load %arg6[%c0_11, %c0_12] : memref<1x128xf32, #tpu.memory_space<vmem>>, vector<1x128xf32>
    %24 = vector.broadcast %23 : vector<1x128xf32> to vector<8x128xf32>
    %25 = arith.addf %22, %24 : vector<8x128xf32>
    %c0_13 = arith.constant 0 : index
    %c0_14 = arith.constant 0 : index
    %26 = vector.load %arg7[%c0_13, %c0_14] : memref<8x128xf32, #tpu.memory_space<vmem>>, vector<8x128xf32>
    tpu.vector_store %arg7[%c0_13, %c0_14], %25 {strides = array<i32>} : memref<8x128xf32, #tpu.memory_space<vmem>>, vector<8x128xf32>,
    return
  }
  func.func @transform_0(%arg0: i32) -> (i32, i32) {
    %c0_i32 = arith.constant 0 : i32
    %c0_i32_0 = arith.constant 0 : i32
    return %arg0, %c0_i32 : i32, i32
  }
  func.func @transform_1(%arg0: i32) -> (i32, i32) {
    %c0_i32 = arith.constant 0 : i32
    %c0_i32_0 = arith.constant 0 : i32
    %c0_i32_1 = arith.constant 0 : i32
    return %c0_i32, %c0_i32_0 : i32, i32
  }
  func.func @transform_2(%arg0: i32) -> (i32, i32) {
    %c0_i32 = arith.constant 0 : i32
    %c0_i32_0 = arith.constant 0 : i32
    %c0_i32_1 = arith.constant 0 : i32
    return %c0_i32, %c0_i32_0 : i32, i32
  }
  func.func @transform_3(%arg0: i32) -> (i32, i32) {
    %c0_i32 = arith.constant 0 : i32
    %c0_i32_0 = arith.constant 0 : i32
    %c0_i32_1 = arith.constant 0 : i32
    return %c0_i32, %c0_i32_0 : i32, i32
  }
  func.func @transform_4(%arg0: i32) -> (i32, i32) {
    %c0_i32 = arith.constant 0 : i32
    %c0_i32_0 = arith.constant 0 : i32
    %c0_i32_1 = arith.constant 0 : i32
    return %c0_i32, %c0_i32_0 : i32, i32
  }
  func.func @transform_5(%arg0: i32) -> (i32, i32) {
    %c0_i32 = arith.constant 0 : i32
    %c0_i32_0 = arith.constant 0 : i32
    %c0_i32_1 = arith.constant 0 : i32
    return %c0_i32, %c0_i32_0 : i32, i32
  }
  func.func @transform_6(%arg0: i32) -> (i32, i32) {
    %c0_i32 = arith.constant 0 : i32
    %c0_i32_0 = arith.constant 0 : i32
    return %arg0, %c0_i32 : i32, i32
  }
}

</mosaic_0001>

<llo_original>
// kernel: _timestep_embedder_forward.1
$region0: #{_timestep_embedder_forward.1}
  #allocation0 [shape = 'u32[]', space=smem, size = 0x4, offset = 0x4, fixed_abs, tag = 'smem constant byte address 0x4 - core index']
  #allocation1 [shape = 'u32[72,128]{1,0:T(1,128)}', space=vmem, size = 0x9000, scoped, tag = 'internal scratch']
  %s0 = inlined_call_operand.vmem [shape: f32[8,1], index: 0, kind: input, shape index: {}]
  %s1 = inlined_call_operand.vmem [shape: f32[1,128], index: 1, kind: input, shape index: {}]
  %s2 = inlined_call_operand.hbm [shape: bf16[256,128], index: 2, kind: input, shape index: {}]
  %s3 = inlined_call_operand.vmem [shape: f32[1,128], index: 3, kind: input, shape index: {}]
  %s4 = inlined_call_operand.hbm [shape: bf16[128,128], index: 4, kind: input, shape index: {}]
  %s5 = inlined_call_operand.vmem [shape: f32[1,128], index: 5, kind: input, shape index: {}]
  %s6 = inlined_call_operand.hbm [shape: f32[8,128], index: 6, kind: output, shape index: {}]
  %s7 = sld [smem:[#allocation0]]
  $region42: #{_timestep_embedder_forward.1} parent=0
    _
  %s9 = ssub.s32 1, %s7
  %s10 = scalar_select 0, %s9, %s7
  $region1: #{_timestep_embedder_forward.1} parent=0
    #allocation2 [shape = 'u8[65536]{0}', space=vmem, size = 0x10000, scoped, tag = 'input window, operand 2, single buffered']
    #allocation3 [shape = 's32[1]{0}', space=sflag, size = 0x4, scoped, tag = 'scoped memory for _timestep_embedder_forward.1']
    #allocation4 [shape = 's32[1]{0}', space=sflag, size = 0x4, scoped, tag = 'scoped memory for _timestep_embedder_forward.1']
    #allocation5 [shape = 'u8[32768]{0}', space=vmem, size = 0x8000, scoped, tag = 'input window, operand 4, single buffered']
    #allocation6 [shape = 's32[1]{0}', space=sflag, size = 0x4, scoped, tag = 'scoped memory for _timestep_embedder_forward.1']
    #allocation7 [shape = 'u8[4096]{0}', space=vmem, size = 0x1000, scoped, tag = 'output window, operand 0, single buffered']
    %11 = vsyncpa [#allocation3], 0
    %12 = vsyncpa [#allocation6], 0
    %13 = vsyncpa [#allocation4], 0
    // Predicated region
    $region2: #{_timestep_embedder_forward.1} parent=1 // pred_check
      _
    $region3: #{_timestep_embedder_forward.1} parent=1 // pred_check_branch
      %15 = sbr.rel (0) target = $region5
    $region4: #{_timestep_embedder_forward.1} parent=1 // pred_region
      _
    $region5: #{_timestep_embedder_forward.1} parent=1 // pred_fallthru
      _
    // Predicated region
    $region6: #{_timestep_embedder_forward.1} parent=1 // pred_check
      _
    $region7: #{_timestep_embedder_forward.1} parent=1 // pred_check_branch
      %17 = sbr.rel (0) target = $region9
    $region8: #{_timestep_embedder_forward.1} parent=1 // pred_region
      _
    $region9: #{_timestep_embedder_forward.1} parent=1 // pred_fallthru
      _
    // Predicated region
    $region10: #{_timestep_embedder_forward.1} parent=1 // pred_check
      _
    $region11: #{_timestep_embedder_forward.1} parent=1 // pred_check_branch
      %19 = sbr.rel (0) target = $region13
    $region12: #{_timestep_embedder_forward.1} parent=1 // pred_region
      %21 = vsyncadd [#allocation3], 0
      %s22 = sshll.u32 %s2, 4
      %s23 = int_to_ptr.hbm [resolvable:$true] %s22
      %s24 = sshll.u32 [#allocation2], 4
      %s25 = int_to_ptr.vmem [resolvable:$true] %s24
      %30 = dma.hbm_to_vmem [thread:$0]  %s23, 2048, %s25, [#allocation3], 64, 64, 4
    $region13: #{_timestep_embedder_forward.1} parent=1 // pred_fallthru
      _
    // Predicated region
    $region14: #{_timestep_embedder_forward.1} parent=1 // pred_check
      _
    $region15: #{_timestep_embedder_forward.1} parent=1 // pred_check_branch
      %32 = sbr.rel (0) target = $region17
    $region16: #{_timestep_embedder_forward.1} parent=1 // pred_region
      _
    $region17: #{_timestep_embedder_forward.1} parent=1 // pred_fallthru
      _
    // Predicated region
    $region18: #{_timestep_embedder_forward.1} parent=1 // pred_check
      _
    $region19: #{_timestep_embedder_forward.1} parent=1 // pred_check_branch
      %34 = sbr.rel (0) target = $region21
    $region20: #{_timestep_embedder_forward.1} parent=1 // pred_region
      %36 = vsyncadd [#allocation6], 0
      %s37 = sshll.u32 %s4, 4
      %s38 = int_to_ptr.hbm [resolvable:$true] %s37
      %s39 = sshll.u32 [#allocation5], 4
      %s40 = int_to_ptr.vmem [resolvable:$true] %s39
      %45 = dma.hbm_to_vmem [thread:$0]  %s38, 1024, %s40, [#allocation6], 64, 64, 4
    $region21: #{_timestep_embedder_forward.1} parent=1 // pred_fallthru
      _
    // Predicated region
    $region22: #{_timestep_embedder_forward.1} parent=1 // pred_check
      _
    $region23: #{_timestep_embedder_forward.1} parent=1 // pred_check_branch
      %47 = sbr.rel (0) target = $region25
    $region24: #{_timestep_embedder_forward.1} parent=1 // pred_region
      _
    $region25: #{_timestep_embedder_forward.1} parent=1 // pred_fallthru
      _
    // Predicated region
    $region26: #{_timestep_embedder_forward.1} parent=1 // pred_check
      _
    $region27: #{_timestep_embedder_forward.1} parent=1 // pred_check_branch
      %49 = sbr.rel (0) target = $region29
    $region28: #{_timestep_embedder_forward.1} parent=1 // pred_region
      %51 = dma.done [#allocation3], 2048
    $region29: #{_timestep_embedder_forward.1} parent=1 // pred_fallthru
      _
    // Predicated region
    $region30: #{_timestep_embedder_forward.1} parent=1 // pred_check
      _
    $region31: #{_timestep_embedder_forward.1} parent=1 // pred_check_branch
      %53 = sbr.rel (0) target = $region33
    $region32: #{_timestep_embedder_forward.1} parent=1 // pred_region
      %55 = dma.done [#allocation6], 1024
    $region33: #{_timestep_embedder_forward.1} parent=1 // pred_fallthru
      _
    %v56 = vld [vmem:[%s0] sm:$0xff]
    %v57 = vld [vmem:[%s1] sm:$0x1]
    %59 = vset.pattern.permute.xlu0 0
    %60 = vperm.xlu0 %59, %v56
    %v61 = vpop.permute.xlu0 %60
    %v64 = vperm.slane %v57, 0
    %v66 = vmul.f32 %v61, %v64
    %v67 = vand.u32 2147483647, %v66
    %vm68 = vcmp.le.f32.partialorder %v67, 0.7853982
    %vm69 = vcmp.lt.s32.totalorder %v66, 0
    %v70 = vand.u32 %v66, 2139095040
    %v71 = vshrl.u32 %v70, 23
    %v72 = vsub.s32 %v71, 127
    %v73 = vand.u32 2147483647, %v66
    %v74 = vand.u32 %v73, 8388607
    %v75 = vor.u32 %v74, 8388608
    %v76 = vsub.s32 0, %v75
    %v77 = vadd.s32 %v72, 1
    %vm78 = vcmp.gt.s32.totalorder %v77, 0
    %v79 = vsel %vm78, %v77, 0
    %v80 = vshrl.u32 %v79, 5
    %v81 = vand.u32 %v79, 31
    %v82 = vsub.s32 32, %v81
    %v83 = vshrl.u32 683565275, %v82
    %v84 = vshll.u32 683565275, %v81
    %v85 = vshrl.u32 2475754826, %v82
    %v86 = vor.u32 %v84, %v85
    %v87 = vshll.u32 2475754826, %v81
    %v88 = vshrl.u32 2131351028, %v82
    %v89 = vor.u32 %v87, %v88
    %v90 = vshll.u32 2131351028, %v81
    %v91 = vshrl.u32 2102212464, %v82
    %v92 = vor.u32 %v90, %v91
    %v93 = vshll.u32 2102212464, %v81
    %v94 = vshrl.u32 920167782, %v82
    %v95 = vor.u32 %v93, %v94
    %v96 = vshll.u32 920167782, %v81
    %v97 = vshrl.u32 1326507024, %v82
    %v98 = vor.u32 %v96, %v97
    %vm99 = vcmp.lt.s32.totalorder %v80, 1
    %vm100 = vcmp.lt.s32.totalorder %v80, 2
    %vm101 = vcmp.lt.s32.totalorder %v80, 3
    %vm102 = vcmp.lt.s32.totalorder %v80, 4
    %v103 = vsel %vm99, %v83, %v86
    %v104 = vsel %vm102, %v92, 2102212464
    %v105 = vsel %vm101, %v89, %v104
    %v106 = vsel %vm100, %v103, %v105
    %v107 = vsel %vm99, %v86, %v89
    %v108 = vsel %vm102, %v95, 920167782
    %v109 = vsel %vm101, %v92, %v108
    %v110 = vsel %vm100, %v107, %v109
    %v111 = vsel %vm99, %v89, %v92
    %v112 = vsel %vm102, %v98, 1326507024
    %v113 = vsel %vm101, %v95, %v112
    %v114 = vsel %vm100, %v111, %v113
    %v115 = vshll.u32 %v75, 8
    %v116 = vand.u32 %v115, 65535
    %v117 = vshrl.u32 %v115, 16
    %v118 = vand.u32 %v114, 65535
    %v119 = vshrl.u32 %v114, 16
    %v120 = vmul.u32 %v116, %v118
    %v121 = vmul.u32 %v116, %v119
    %v122 = vmul.u32 %v117, %v118
    %v123 = vmul.u32 %v117, %v119
    %v124 = vshll.u32 %v121, 16
    %v125 = vshrl.u32 %v121, 16
    %v126 = vshll.u32 %v122, 16
    %v127 = vshrl.u32 %v122, 16
    %vm128 = vc.u32 %v120, %v124
    %v129 = vsel %vm128, 1, 0
    %v130 = vadd.s32 %v120, %v124
    %v131 = vadd.s32 %v123, %v129
    %vm132 = vc.u32 %v130, %v126
    %v133 = vsel %vm132, 1, 0
    %v134 = vadd.s32 %v130, %v126
    %v135 = vadd.s32 %v131, %v133
    %v136 = vadd.s32 %v135, %v125
    %v137 = vadd.s32 %v136, %v127
    %v138 = vand.u32 %v115, 65535
    %v139 = vshrl.u32 %v115, 16
    %v140 = vand.u32 %v110, 65535
    %v141 = vshrl.u32 %v110, 16
    %v142 = vmul.u32 %v138, %v140
    %v143 = vmul.u32 %v138, %v141
    %v144 = vmul.u32 %v139, %v140
    %v145 = vmul.u32 %v139, %v141
    %v146 = vshll.u32 %v143, 16
    %v147 = vshrl.u32 %v143, 16
    %v148 = vshll.u32 %v144, 16
    %v149 = vshrl.u32 %v144, 16
    %vm150 = vc.u32 %v142, %v146
    %v151 = vsel %vm150, 1, 0
    %v152 = vadd.s32 %v142, %v146
    %v153 = vadd.s32 %v145, %v151
    %vm154 = vc.u32 %v152, %v148
    %v155 = vsel %vm154, 1, 0
    %v156 = vadd.s32 %v152, %v148
    %v157 = vadd.s32 %v153, %v155
    %v158 = vadd.s32 %v157, %v147
    %v159 = vadd.s32 %v158, %v149
    %v160 = vmul.u32 %v115, %v106
    %v161 = vadd.s32 %v137, %v156
    %vm162 = vc.u32 %v137, %v156
    %v163 = vadd.s32 %v159, 1
    %v164 = vsel %vm162, %v163, %v159
    %v165 = vadd.s32 %v160, %v164
    %v166 = vadd.s32 %v165, 536870912
    %v167 = vshrl.u32 %v166, 30
    %v168 = vshll.u32 %v167, 30
    %v169 = vsub.s32 %v165, %v168
    %vm170 = vcmp.lt.s32.totalorder %v169, 0
    %v171 = vsub.s32 0, %v169
    %v172 = vsel %vm170, %v171, %v169
    %v173 = vclz %v172
    %v174 = vsub.s32 %v173, 2
    %vm175 = vcmp.gt.s32.totalorder 0, %v174
    %v176 = vsel %vm175, 0, %v174
    %v177 = vsub.s32 32, %v176
    %v178 = vshll.u32 %v169, %v176
    %v179 = vshrl.u32 %v161, %v177
    %v180 = vor.u32 %v178, %v179
    %v181 = vsub.s32 4294967266, %v176
    %v182 = vadd.s32 %v181, 127
    %v183 = vshll.u32 %v182, 23
    %v184 = vor.u32 4788187, %v183
    %v185 = vand.u32 2147483647, %v184
    %v187 = vcvt.s32.f32 %v180
    %v188 = vmul.f32 %v187, %v185
    %v189 = vxor.u32 %v188, 2147483648
    %v190 = vsel %vm69, %v189, %v188
    %v191 = vsub.s32 4, %v167
    %v192 = vsel %vm69, %v191, %v167
    %v193 = vsel %vm68, %v66, %v190
    %v194 = vsel %vm68, 0, %v192
    %v195 = vmul.f32 %v193, %v193
    %v196 = vmul.f32 %v195, -0.001358992
    %v197 = vadd.f32 %v196, 0.041655596
    %v198 = vmul.f32 %v195, %v197
    %v199 = vadd.f32 %v198, -0.4999988
    %v200 = vmul.f32 %v195, %v199
    %v201 = vadd.f32 1.0, %v200
    %v202 = vmul.f32 %v193, %v193
    %v203 = vmul.f32 %v202, -0.00019511016
    %v204 = vadd.f32 %v203, 0.008332121
    %v205 = vmul.f32 %v202, %v204
    %v206 = vadd.f32 %v205, -0.16666654
    %v207 = vmul.f32 %v202, %v206
    %v208 = vadd.f32 %v207, 1.0
    %v209 = vmul.f32 %v208, %v193
    %vm210 = vweird.f32 %v66
    %v211 = vand.u32 %v194, 3
    %vm212 = vcmp.lt.s32.totalorder %v211, 2
    %vm213 = vcmp.eq.s32.totalorder %v211, 0
    %v214 = vxor.u32 %v209, 2147483648
    %v215 = vsel %vm213, %v201, %v214
    %vm216 = vcmp.eq.s32.totalorder %v211, 2
    %v217 = vxor.u32 %v201, 2147483648
    %v218 = vsel %vm216, %v217, %v209
    %v219 = vsel %vm212, %v215, %v218
    %v220 = vsel %vm210, nan, %v219
    %v221 = vand.u32 2147483647, %v66
    %vm222 = vcmp.le.f32.partialorder %v221, 0.7853982
    %vm223 = vcmp.lt.s32.totalorder %v66, 0
    %v224 = vand.u32 %v66, 2139095040
    %v225 = vshrl.u32 %v224, 23
    %v226 = vsub.s32 %v225, 127
    %v227 = vand.u32 2147483647, %v66
    %v228 = vand.u32 %v227, 8388607
    %v229 = vor.u32 %v228, 8388608
    %v230 = vsub.s32 0, %v229
    %v231 = vadd.s32 %v226, 1
    %vm232 = vcmp.gt.s32.totalorder %v231, 0
    %v233 = vsel %vm232, %v231, 0
    %v234 = vshrl.u32 %v233, 5
    %v235 = vand.u32 %v233, 31
    %v236 = vsub.s32 32, %v235
    %v237 = vshrl.u32 683565275, %v236
    %v238 = vshll.u32 683565275, %v235
    %v239 = vshrl.u32 2475754826, %v236
    %v240 = vor.u32 %v238, %v239
    %v241 = vshll.u32 2475754826, %v235
    %v242 = vshrl.u32 2131351028, %v236
    %v243 = vor.u32 %v241, %v242
    %v244 = vshll.u32 2131351028, %v235
    %v245 = vshrl.u32 2102212464, %v236
    %v246 = vor.u32 %v244, %v245
    %v247 = vshll.u32 2102212464, %v235
    %v248 = vshrl.u32 920167782, %v236
    %v249 = vor.u32 %v247, %v248
    %v250 = vshll.u32 920167782, %v235
    %v251 = vshrl.u32 1326507024, %v236
    %v252 = vor.u32 %v250, %v251
    %vm253 = vcmp.lt.s32.totalorder %v234, 1
    %vm254 = vcmp.lt.s32.totalorder %v234, 2
    %vm255 = vcmp.lt.s32.totalorder %v234, 3
    %vm256 = vcmp.lt.s32.totalorder %v234, 4
    %v257 = vsel %vm253, %v237, %v240
    %v258 = vsel %vm256, %v246, 2102212464
    %v259 = vsel %vm255, %v243, %v258
    %v260 = vsel %vm254, %v257, %v259
    %v261 = vsel %vm253, %v240, %v243
    %v262 = vsel %vm256, %v249, 920167782
    %v263 = vsel %vm255, %v246, %v262
    %v264 = vsel %vm254, %v261, %v263
    %v265 = vsel %vm253, %v243, %v246
    %v266 = vsel %vm256, %v252, 1326507024
    %v267 = vsel %vm255, %v249, %v266
    %v268 = vsel %vm254, %v265, %v267
    %v269 = vshll.u32 %v229, 8
    %v270 = vand.u32 %v269, 65535
    %v271 = vshrl.u32 %v269, 16
    %v272 = vand.u32 %v268, 65535
    %v273 = vshrl.u32 %v268, 16
    %v274 = vmul.u32 %v270, %v272
    %v275 = vmul.u32 %v270, %v273
    %v276 = vmul.u32 %v271, %v272
    %v277 = vmul.u32 %v271, %v273
    %v278 = vshll.u32 %v275, 16
    %v279 = vshrl.u32 %v275, 16
    %v280 = vshll.u32 %v276, 16
    %v281 = vshrl.u32 %v276, 16
    %vm282 = vc.u32 %v274, %v278
    %v283 = vsel %vm282, 1, 0
    %v284 = vadd.s32 %v274, %v278
    %v285 = vadd.s32 %v277, %v283
    %vm286 = vc.u32 %v284, %v280
    %v287 = vsel %vm286, 1, 0
    %v288 = vadd.s32 %v284, %v280
    %v289 = vadd.s32 %v285, %v287
    %v290 = vadd.s32 %v289, %v279
    %v291 = vadd.s32 %v290, %v281
    %v292 = vand.u32 %v269, 65535
    %v293 = vshrl.u32 %v269, 16
    %v294 = vand.u32 %v264, 65535
    %v295 = vshrl.u32 %v264, 16
    %v296 = vmul.u32 %v292, %v294
    %v297 = vmul.u32 %v292, %v295
    %v298 = vmul.u32 %v293, %v294
    %v299 = vmul.u32 %v293, %v295
    %v300 = vshll.u32 %v297, 16
    %v301 = vshrl.u32 %v297, 16
    %v302 = vshll.u32 %v298, 16
    %v303 = vshrl.u32 %v298, 16
    %vm304 = vc.u32 %v296, %v300
    %v305 = vsel %vm304, 1, 0
    %v306 = vadd.s32 %v296, %v300
    %v307 = vadd.s32 %v299, %v305
    %vm308 = vc.u32 %v306, %v302
    %v309 = vsel %vm308, 1, 0
    %v310 = vadd.s32 %v306, %v302
    %v311 = vadd.s32 %v307, %v309
    %v312 = vadd.s32 %v311, %v301
    %v313 = vadd.s32 %v312, %v303
    %v314 = vmul.u32 %v269, %v260
    %v315 = vadd.s32 %v291, %v310
    %vm316 = vc.u32 %v291, %v310
    %v317 = vadd.s32 %v313, 1
    %v318 = vsel %vm316, %v317, %v313
    %v319 = vadd.s32 %v314, %v318
    %v320 = vadd.s32 %v319, 536870912
    %v321 = vshrl.u32 %v320, 30
    %v322 = vshll.u32 %v321, 30
    %v323 = vsub.s32 %v319, %v322
    %vm324 = vcmp.lt.s32.totalorder %v323, 0
    %v325 = vsub.s32 0, %v323
    %v326 = vsel %vm324, %v325, %v323
    %v327 = vclz %v326
    %v328 = vsub.s32 %v327, 2
    %vm329 = vcmp.gt.s32.totalorder 0, %v328
    %v330 = vsel %vm329, 0, %v328
    %v331 = vsub.s32 32, %v330
    %v332 = vshll.u32 %v323, %v330
    %v333 = vshrl.u32 %v315, %v331
    %v334 = vor.u32 %v332, %v333
    %v335 = vsub.s32 4294967266, %v330
    %v336 = vadd.s32 %v335, 127
    %v337 = vshll.u32 %v336, 23
    %v338 = vor.u32 4788187, %v337
    %v339 = vand.u32 2147483647, %v338
    %v341 = vcvt.s32.f32 %v334
    %v342 = vmul.f32 %v341, %v339
    %v343 = vxor.u32 %v342, 2147483648
    %v344 = vsel %vm223, %v343, %v342
    %v345 = vsub.s32 4, %v321
    %v346 = vsel %vm223, %v345, %v321
    %v347 = vsel %vm222, %v66, %v344
    %v348 = vsel %vm222, 0, %v346
    %v349 = vmul.f32 %v347, %v347
    %v350 = vmul.f32 %v349, -0.001358992
    %v351 = vadd.f32 %v350, 0.041655596
    %v352 = vmul.f32 %v349, %v351
    %v353 = vadd.f32 %v352, -0.4999988
    %v354 = vmul.f32 %v349, %v353
    %v355 = vadd.f32 1.0, %v354
    %v356 = vmul.f32 %v347, %v347
    %v357 = vmul.f32 %v356, -0.00019511016
    %v358 = vadd.f32 %v357, 0.008332121
    %v359 = vmul.f32 %v356, %v358
    %v360 = vadd.f32 %v359, -0.16666654
    %v361 = vmul.f32 %v356, %v360
    %v362 = vadd.f32 %v361, 1.0
    %v363 = vmul.f32 %v362, %v347
    %vm364 = vweird.f32 %v66
    %v365 = vadd.s32 %v348, 3
    %v366 = vand.u32 %v365, 3
    %vm367 = vcmp.lt.s32.totalorder %v366, 2
    %vm368 = vcmp.eq.s32.totalorder %v366, 0
    %v369 = vxor.u32 %v363, 2147483648
    %v370 = vsel %vm368, %v355, %v369
    %vm371 = vcmp.eq.s32.totalorder %v366, 2
    %v372 = vxor.u32 %v355, 2147483648
    %v373 = vsel %vm371, %v372, %v363
    %v374 = vsel %vm367, %v370, %v373
    %v375 = vsel %vm364, nan, %v374
    %v376 = vpack.c.bf16 %v220, %v220
    %v377 = vpack.c.bf16 %v375, %v375
    %v378 = vld [vmem:[#allocation2] sm:$0xf]
    %v379 = vld [vmem:[#allocation2 + $0x4] sm:$0xf]
    %v380 = vld [vmem:[#allocation2 + $0x8] sm:$0xf]
    %v381 = vld [vmem:[#allocation2 + $0xc] sm:$0xf]
    %v382 = vld [vmem:[#allocation2 + $0x10] sm:$0xf]
    %v383 = vld [vmem:[#allocation2 + $0x14] sm:$0xf]
    %v384 = vld [vmem:[#allocation2 + $0x18] sm:$0xf]
    %v385 = vld [vmem:[#allocation2 + $0x1c] sm:$0xf]
    %v386 = vld [vmem:[#allocation2 + $0x20] sm:$0xf]
    %v387 = vld [vmem:[#allocation2 + $0x24] sm:$0xf]
    %v388 = vld [vmem:[#allocation2 + $0x28] sm:$0xf]
    %v389 = vld [vmem:[#allocation2 + $0x2c] sm:$0xf]
    %v390 = vld [vmem:[#allocation2 + $0x30] sm:$0xf]
    %v391 = vld [vmem:[#allocation2 + $0x34] sm:$0xf]
    %v392 = vld [vmem:[#allocation2 + $0x38] sm:$0xf]
    %v393 = vld [vmem:[#allocation2 + $0x3c] sm:$0xf]
    %v394 = vld [vmem:[#allocation2 + $0x40] sm:$0xf]
    %v395 = vld [vmem:[#allocation2 + $0x44] sm:$0xf]
    %v396 = vld [vmem:[#allocation2 + $0x48] sm:$0xf]
    %v397 = vld [vmem:[#allocation2 + $0x4c] sm:$0xf]
    %v398 = vld [vmem:[#allocation2 + $0x50] sm:$0xf]
    %v399 = vld [vmem:[#allocation2 + $0x54] sm:$0xf]
    %v400 = vld [vmem:[#allocation2 + $0x58] sm:$0xf]
    %v401 = vld [vmem:[#allocation2 + $0x5c] sm:$0xf]
    %v402 = vld [vmem:[#allocation2 + $0x60] sm:$0xf]
    %v403 = vld [vmem:[#allocation2 + $0x64] sm:$0xf]
    %v404 = vld [vmem:[#allocation2 + $0x68] sm:$0xf]
    %v405 = vld [vmem:[#allocation2 + $0x6c] sm:$0xf]
    %v406 = vld [vmem:[#allocation2 + $0x70] sm:$0xf]
    %v407 = vld [vmem:[#allocation2 + $0x74] sm:$0xf]
    %v408 = vld [vmem:[#allocation2 + $0x78] sm:$0xf]
    %v409 = vld [vmem:[#allocation2 + $0x7c] sm:$0xf]
    %v410 = vld [vmem:[%s3] sm:$0x1]
    %v412 = vperm.slane %v410, 0
    %v446 = vunpack.c.l.b16 %v378
    %v447 = vunpack.c.l.b16 %v379
    %v448 = vunpack.c.l.b16 %v380
    %v449 = vunpack.c.l.b16 %v381
    %v450 = vunpack.c.l.b16 %v382
    %v451 = vunpack.c.l.b16 %v383
    %v452 = vunpack.c.l.b16 %v384
    %v453 = vunpack.c.l.b16 %v385
    %v454 = vunpack.c.l.b16 %v386
    %v455 = vunpack.c.l.b16 %v387
    %v456 = vunpack.c.l.b16 %v388
    %v457 = vunpack.c.l.b16 %v389
    %v458 = vunpack.c.l.b16 %v390
    %v459 = vunpack.c.l.b16 %v391
    %v460 = vunpack.c.l.b16 %v392
    %v461 = vunpack.c.l.b16 %v393
    %v462 = vunpack.c.l.b16 %v394
    %v463 = vunpack.c.l.b16 %v395
    %v464 = vunpack.c.l.b16 %v396
    %v465 = vunpack.c.l.b16 %v397
    %v466 = vunpack.c.l.b16 %v398
    %v467 = vunpack.c.l.b16 %v399
    %v468 = vunpack.c.l.b16 %v400
    %v469 = vunpack.c.l.b16 %v401
    %v470 = vunpack.c.l.b16 %v402
    %v471 = vunpack.c.l.b16 %v403
    %v472 = vunpack.c.l.b16 %v404
    %v473 = vunpack.c.l.b16 %v405
    %v474 = vunpack.c.l.b16 %v406
    %v475 = vunpack.c.l.b16 %v407
    %v476 = vunpack.c.l.b16 %v408
    %v477 = vunpack.c.l.b16 %v409
    %v478 = vpack.c.b16 %v447, %v446
    %v479 = vpack.c.b16 %v449, %v448
    %v480 = vpack.c.b16 %v451, %v450
    %v481 = vpack.c.b16 %v453, %v452
    %v482 = vpack.c.b16 %v455, %v454
    %v483 = vpack.c.b16 %v457, %v456
    %v484 = vpack.c.b16 %v459, %v458
    %v485 = vpack.c.b16 %v461, %v460
    %v486 = vpack.c.b16 %v463, %v462
    %v487 = vpack.c.b16 %v465, %v464
    %v488 = vpack.c.b16 %v467, %v466
    %v489 = vpack.c.b16 %v469, %v468
    %v490 = vpack.c.b16 %v471, %v470
    %v491 = vpack.c.b16 %v473, %v472
    %v492 = vpack.c.b16 %v475, %v474
    %v493 = vpack.c.b16 %v477, %v476
    %510 = vmatpush.bf16.msra.mxu0 %v485
    %511 = vmatpush.bf16.msra.mxu0 %v484
    %512 = vmatpush.bf16.msra.mxu0 %v483
    %513 = vmatpush.bf16.msra.mxu0 %v482
    %514 = vmatpush.bf16.msra.mxu0 %v481
    %515 = vmatpush.bf16.msra.mxu0 %v480
    %516 = vmatpush.bf16.msra.mxu0 %v479
    %517 = vmatpush.bf16.msra.mxu0 %v478
    %518 = vmatmul.bf16.gmra.mxu0 %v376
    %v519 = vpop.f32.mrf.mxu0
    %v520 = vadd.f32 %v412, %v519
    %v521 = vpop.f32.mrf.mxu0
    %522 = vdwg.mxu0
    %523 = vmatpush.bf16.msra.mxu0 %v493
    %524 = vmatpush.bf16.msra.mxu0 %v492
    %525 = vmatpush.bf16.msra.mxu0 %v491
    %526 = vmatpush.bf16.msra.mxu0 %v490
    %527 = vmatpush.bf16.msra.mxu0 %v489
    %528 = vmatpush.bf16.msra.mxu0 %v488
    %529 = vmatpush.bf16.msra.mxu0 %v487
    %530 = vmatpush.bf16.msra.mxu0 %v486
    %531 = vmatmul.bf16.gmra.mxu0 %v377
    %v532 = vpop.f32.mrf.mxu0
    %v533 = vadd.f32 %v520, %v532
    %v534 = vpop.f32.mrf.mxu0
    %535 = vdwg.mxu0
    %v536 = vxor.u32 %v533, 2147483648
    %v537 = vmul.f32 %v536, 1.442695
    %v538 = vpow.pop %v537
    %v539 = vadd.f32 %v538, 1.0
    %v540 = vrcp.pop %v539
    %v541 = vmul.f32 %v539, %v540
    %v542 = vsub.f32 1.0, %v541
    %v543 = vmul.f32 %v540, %v542
    %v544 = vadd.f32 %v540, %v543
    %vm545 = vweird.f32 %v539
    %vm546 = vweird.f32 %v540
    %vm547 = vmor %vm545, %vm546
    %v548 = vsel %vm547, %v540, %v544
    %v549 = vand.u32 2147483647, %v539
    %vm550 = vcmp.eq.f32.partialorder %v549, 8.507059e+37
    %v551 = vand.u32 %v539, 2147483648
    %v552 = vor.u32 1.1754944e-38, %v551
    %v553 = vsel %vm550, %v552, %v548
    %v554 = vmul.f32 1.0, %v553
    %v555 = vmul.f32 %v533, %v554
    %v556 = vpack.c.bf16 %v555, %v555
    %v557 = vld [vmem:[#allocation5] sm:$0xf]
    %v558 = vld [vmem:[#allocation5 + $0x4] sm:$0xf]
    %v559 = vld [vmem:[#allocation5 + $0x8] sm:$0xf]
    %v560 = vld [vmem:[#allocation5 + $0xc] sm:$0xf]
    %v561 = vld [vmem:[#allocation5 + $0x10] sm:$0xf]
    %v562 = vld [vmem:[#allocation5 + $0x14] sm:$0xf]
    %v563 = vld [vmem:[#allocation5 + $0x18] sm:$0xf]
    %v564 = vld [vmem:[#allocation5 + $0x1c] sm:$0xf]
    %v565 = vld [vmem:[#allocation5 + $0x20] sm:$0xf]
    %v566 = vld [vmem:[#allocation5 + $0x24] sm:$0xf]
    %v567 = vld [vmem:[#allocation5 + $0x28] sm:$0xf]
    %v568 = vld [vmem:[#allocation5 + $0x2c] sm:$0xf]
    %v569 = vld [vmem:[#allocation5 + $0x30] sm:$0xf]
    %v570 = vld [vmem:[#allocation5 + $0x34] sm:$0xf]
    %v571 = vld [vmem:[#allocation5 + $0x38] sm:$0xf]
    %v572 = vld [vmem:[#allocation5 + $0x3c] sm:$0xf]
    %v573 = vld [vmem:[%s5] sm:$0x1]
    %v575 = vperm.slane %v573, 0
    %v593 = vunpack.c.l.b16 %v557
    %v594 = vunpack.c.l.b16 %v558
    %v595 = vunpack.c.l.b16 %v559
    %v596 = vunpack.c.l.b16 %v560
    %v597 = vunpack.c.l.b16 %v561
    %v598 = vunpack.c.l.b16 %v562
    %v599 = vunpack.c.l.b16 %v563
    %v600 = vunpack.c.l.b16 %v564
    %v601 = vunpack.c.l.b16 %v565
    %v602 = vunpack.c.l.b16 %v566
    %v603 = vunpack.c.l.b16 %v567
    %v604 = vunpack.c.l.b16 %v568
    %v605 = vunpack.c.l.b16 %v569
    %v606 = vunpack.c.l.b16 %v570
    %v607 = vunpack.c.l.b16 %v571
    %v608 = vunpack.c.l.b16 %v572
    %v609 = vpack.c.b16 %v594, %v593
    %v610 = vpack.c.b16 %v596, %v595
    %v611 = vpack.c.b16 %v598, %v597
    %v612 = vpack.c.b16 %v600, %v599
    %v613 = vpack.c.b16 %v602, %v601
    %v614 = vpack.c.b16 %v604, %v603
    %v615 = vpack.c.b16 %v606, %v605
    %v616 = vpack.c.b16 %v608, %v607
    %625 = vmatpush.bf16.msra.mxu0 %v616
    %626 = vmatpush.bf16.msra.mxu0 %v615
    %627 = vmatpush.bf16.msra.mxu0 %v614
    %628 = vmatpush.bf16.msra.mxu0 %v613
    %629 = vmatpush.bf16.msra.mxu0 %v612
    %630 = vmatpush.bf16.msra.mxu0 %v611
    %631 = vmatpush.bf16.msra.mxu0 %v610
    %632 = vmatpush.bf16.msra.mxu0 %v609
    %633 = vmatmul.bf16.gmra.mxu0 %v556
    %v634 = vpop.f32.mrf.mxu0
    %v635 = vadd.f32 %v575, %v634
    %v636 = vpop.f32.mrf.mxu0
    %637 = vdwg.mxu0
    %638 = vst [vmem:[#allocation7] sm:$0xff] %v635
    // Predicated region
    $region34: #{_timestep_embedder_forward.1} parent=1 // pred_check
      _
    $region35: #{_timestep_embedder_forward.1} parent=1 // pred_check_branch
      %640 = sbr.rel (0) target = $region37
    $region36: #{_timestep_embedder_forward.1} parent=1 // pred_region
      %642 = vsyncadd [#allocation4], 0
      %s644 = sshll.u32 [#allocation7], 4
      %s645 = int_to_ptr.vmem [resolvable:$true] %s644
      %s646 = sshll.u32 %s6, 4
      %s647 = int_to_ptr.hbm [resolvable:$true] %s646
      %649 = dma.vmem_to_hbm [thread:$0]  %s645, 128, %s647, [#allocation4]
    $region37: #{_timestep_embedder_forward.1} parent=1 // pred_fallthru
      _
    // Predicated region
    $region38: #{_timestep_embedder_forward.1} parent=1 // pred_check
      _
    $region39: #{_timestep_embedder_forward.1} parent=1 // pred_check_branch
      %651 = sbr.rel (0) target = $region41
    $region40: #{_timestep_embedder_forward.1} parent=1 // pred_region
      %653 = dma.done [#allocation4], 128
    $region41: #{_timestep_embedder_forward.1} parent=1 // pred_fallthru
      _
    %654 = vsyncpa [#allocation3], 1
    %655 = vsyncpa [#allocation6], 1
    %656 = vsyncpa [#allocation4], 1

</llo_original>
